<compile_context>
chip_gen: v6e
topology: v6e:2x2x1
jax: 0.10.0
libtpu: 0.0.40
codegen_flags: <defaults>
</compile_context>

<pallas_src>
import math
from functools import lru_cache, partial

import numpy as np
import jax
import jax.numpy as jnp
from jax.experimental import pallas as pl
from jax.experimental.pallas import tpu as pltpu

_NEG = -1e30  # additive mask value for padded logit lanes (applied AFTER tanh)


def _round_up(x, m):
    return ((x + m - 1) // m) * m


# ---------------------------------------------------------------------------
# Kernels
# ---------------------------------------------------------------------------
def _batched_head_kernel(compute_logp, hd_ref, obs_ref, w1_ref, b1_ref, w2_ref,
                         b2_ref, w3_ref, b3_ref, mask_ref, *rest):
    """One batch tile, single head (head chosen by the W3/b3/mask BlockSpecs)."""
    del hd_ref  # only used by the index_maps
    if compute_logp:
        act_ref, logits_ref, logp_ref = rest
    else:
        (logits_ref,) = rest

    x = obs_ref[...].astype(jnp.bfloat16)                                 # [TB, D]
    h1 = jnp.maximum(
        jnp.dot(x, w1_ref[...], preferred_element_type=jnp.float32) + b1_ref[...],
        0.0)
    h2 = jnp.maximum(
        jnp.dot(h1.astype(jnp.bfloat16), w2_ref[...],
                preferred_element_type=jnp.float32) + b2_ref[...],
        0.0)
    logits = jnp.tanh(
        jnp.dot(h2.astype(jnp.bfloat16), w3_ref[0],
                preferred_element_type=jnp.float32) + b3_ref[0])          # [TB, PAD]
    logits_ref[...] = logits

    if compute_logp:
        masked = logits + mask_ref[0]                                     # pads -> -1e30
        m = jnp.max(masked, axis=-1, keepdims=True)
        lse = m + jnp.log(jnp.sum(jnp.exp(masked - m), axis=-1, keepdims=True))
        act = act_ref[...]                                                # [TB, 1] int32
        cols = jax.lax.broadcasted_iota(jnp.int32, masked.shape, 1)
        picked = jnp.max(jnp.where(cols == act, masked, _NEG), axis=-1, keepdims=True)
        logp_ref[...] = picked - lse


def _per_sample_kernel(compute_logp, idx_ref, act_ref, obs_ref, w1_ref, b1_ref,
                       w2_ref, b2_ref, w3_ref, b3_ref, mask_ref, logits_ref,
                       *maybe_logp):
    """One sample per grid step; head weights selected via prefetched act_idx."""
    del idx_ref  # only used by the index_maps
    x = obs_ref[0].astype(jnp.bfloat16)                                   # [1, D]
    h1 = jnp.maximum(
        jnp.dot(x, w1_ref[...], preferred_element_type=jnp.float32) + b1_ref[...],
        0.0)
    h2 = jnp.maximum(
        jnp.dot(h1.astype(jnp.bfloat16), w2_ref[...],
                preferred_element_type=jnp.float32) + b2_ref[...],
        0.0)
    logits = jnp.tanh(
        jnp.dot(h2.astype(jnp.bfloat16), w3_ref[0],
                preferred_element_type=jnp.float32) + b3_ref[0])          # [1, PAD]
    logits_ref[0] = logits

    if compute_logp:
        (logp_ref,) = maybe_logp
        i = pl.program_id(0)
        a = act_ref[i]                                                    # scalar int32
        masked = logits + mask_ref[0]
        m = jnp.max(masked, axis=-1, keepdims=True)
        lse = m + jnp.log(jnp.sum(jnp.exp(masked - m), axis=-1, keepdims=True))
        cols = jax.lax.broadcasted_iota(jnp.int32, masked.shape, 1)
        picked = jnp.max(jnp.where(cols == a, masked, _NEG), axis=-1, keepdims=True)
        logp_ref[0] = picked - lse


# ---------------------------------------------------------------------------
# pallas_call builders (cached -> one trace/compile per static config)
# ---------------------------------------------------------------------------
@lru_cache(maxsize=None)
def _get_batched_call(Bp, tile_b, obs_dim, pad, n_heads, compute_logp):
    del n_heads
    num_tiles = Bp // tile_b
    in_specs = [
        pl.BlockSpec((tile_b, obs_dim), lambda i, hd: (i, 0)),       # obs tile
        pl.BlockSpec((obs_dim, 128),    lambda i, hd: (0, 0)),       # w1 (resident)
        pl.BlockSpec((1, 128),          lambda i, hd: (0, 0)),       # b1
        pl.BlockSpec((128, 64),         lambda i, hd: (0, 0)),       # w2
        pl.BlockSpec((1, 64),           lambda i, hd: (0, 0)),       # b2
        pl.BlockSpec((1, 64, pad),      lambda i, hd: (hd[0], 0, 0)),  # w3 (head select)
        pl.BlockSpec((1, 1, pad),       lambda i, hd: (hd[0], 0, 0)),  # b3
        pl.BlockSpec((1, 1, pad),       lambda i, hd: (hd[0], 0, 0)),  # pad mask
    ]
    out_shape = [jax.ShapeDtypeStruct((Bp, pad), jnp.float32)]
    out_specs = [pl.BlockSpec((tile_b, pad), lambda i, hd: (i, 0))]
    if compute_logp:
        in_specs.append(pl.BlockSpec((tile_b, 1), lambda i, hd: (i, 0)))   # act
        out_shape.append(jax.ShapeDtypeStruct((Bp, 1), jnp.float32))
        out_specs.append(pl.BlockSpec((tile_b, 1), lambda i, hd: (i, 0)))
    call = pl.pallas_call(
        partial(_batched_head_kernel, compute_logp),
        grid_spec=pltpu.PrefetchScalarGridSpec(
            num_scalar_prefetch=1,
            grid=(num_tiles,),
            in_specs=in_specs,
            out_specs=out_specs,
        ),
        out_shape=tuple(out_shape),
        compiler_params=pltpu.CompilerParams(dimension_semantics=("parallel",)),
    )
    return jax.jit(call)


@lru_cache(maxsize=None)
def _get_per_sample_call(B, obs_dim, pad, n_heads, compute_logp):
    del n_heads
    in_specs = [
        pl.BlockSpec((1, 1, obs_dim), lambda i, idx, a: (i, 0, 0)),     # obs[i]
        pl.BlockSpec((obs_dim, 128),  lambda i, idx, a: (0, 0)),        # w1 (resident)
        pl.BlockSpec((1, 128),        lambda i, idx, a: (0, 0)),        # b1
        pl.BlockSpec((128, 64),       lambda i, idx, a: (0, 0)),        # w2
        pl.BlockSpec((1, 64),         lambda i, idx, a: (0, 0)),        # b2
        pl.BlockSpec((1, 64, pad),    lambda i, idx, a: (idx[i], 0, 0)),  # w3[head_i]
        pl.BlockSpec((1, 1, pad),     lambda i, idx, a: (idx[i], 0, 0)),  # b3[head_i]
        pl.BlockSpec((1, 1, pad),     lambda i, idx, a: (idx[i], 0, 0)),  # mask[head_i]
    ]
    out_shape = [jax.ShapeDtypeStruct((B, 1, pad), jnp.float32)]
    out_specs = [pl.BlockSpec((1, 1, pad), lambda i, idx, a: (i, 0, 0))]
    if compute_logp:
        out_shape.append(jax.ShapeDtypeStruct((B, 1, 1), jnp.float32))
        out_specs.append(pl.BlockSpec((1, 1, 1), lambda i, idx, a: (i, 0, 0)))
    call = pl.pallas_call(
        partial(_per_sample_kernel, compute_logp),
        grid_spec=pltpu.PrefetchScalarGridSpec(
            num_scalar_prefetch=2,
            grid=(B,),
            in_specs=in_specs,
            out_specs=out_specs,
        ),
        out_shape=tuple(out_shape),
        compiler_params=pltpu.CompilerParams(dimension_semantics=("parallel",)),
    )
    return jax.jit(call)


# ---------------------------------------------------------------------------
# Params + forward (mirrors MLPCategoricalActor_DSE.forward)
# ---------------------------------------------------------------------------
def init_params(obs_dim, act_dim_list, seed=0):
    """torch.nn.Linear-style init. Weights stored [in, out]; heads padded to PAD lanes."""
    key = jax.random.PRNGKey(seed)
    n_heads = len(act_dim_list)
    pad = _round_up(max(act_dim_list), 128)

    def linear(k, fan_in, fan_out):
        kw, kb = jax.random.split(k)
        bound = 1.0 / math.sqrt(fan_in)
        w = jax.random.uniform(kw, (fan_in, fan_out), jnp.float32, -bound, bound)
        b = jax.random.uniform(kb, (1, fan_out), jnp.float32, -bound, bound)
        return w, b

    keys = jax.random.split(key, 2 + n_heads)
    w1, b1 = linear(keys[0], obs_dim, 128)
    w2, b2 = linear(keys[1], 128, 64)

    w3_all = jnp.zeros((n_heads, 64, pad), jnp.float32)
    b3_all = jnp.zeros((n_heads, 1, pad), jnp.float32)
    mask_all = jnp.full((n_heads, 1, pad), _NEG, jnp.float32)
    for i, ad in enumerate(act_dim_list):
        w3, b3 = linear(keys[2 + i], 64, ad)
        w3_all = w3_all.at[i, :, :ad].set(w3)
        b3_all = b3_all.at[i, :, :ad].set(b3)
        mask_all = mask_all.at[i, :, :ad].set(0.0)

    return {
        "w1": w1.astype(jnp.bfloat16),      # MXU operands stored bf16 (f32 accumulate)
        "b1": b1,
        "w2": w2.astype(jnp.bfloat16),
        "b2": b2,
        "w3_all": w3_all.astype(jnp.bfloat16),
        "b3_all": b3_all,
        "mask_all": mask_all,
        "act_dim_list": tuple(int(a) for a in act_dim_list),
        "pad": int(pad),
    }


def forward(params, obs, act_idx, act=None):
    """Returns (logits [B, act_dim], logp [B] | None) for int act_idx,
    or (list of per-sample logits, logp [B] | None) for array act_idx."""
    obs = jnp.asarray(obs, jnp.float32)
    B, obs_dim = obs.shape
    pad = params["pad"]
    n_heads = params["w3_all"].shape[0]
    act_dims = params["act_dim_list"]
    weights = (params["w1"], params["b1"], params["w2"], params["b2"],
               params["w3_all"], params["b3_all"], params["mask_all"])
    compute_logp = act is not None

    if isinstance(act_idx, (int, np.integer)):
        head = int(act_idx)
        bp0 = _round_up(B, 8)
        if bp0 <= 512:
            tile_b, Bp = bp0, bp0
        else:
            tile_b, Bp = 512, _round_up(B, 512)
        obs_p = jnp.pad(obs, ((0, Bp - B), (0, 0)))
        call = _get_batched_call(Bp, tile_b, obs_dim, pad, n_heads, compute_logp)
        hd = jnp.array([head], jnp.int32)
        args = [hd, obs_p, *weights]
        if compute_logp:
            act_p = jnp.pad(jnp.asarray(act, jnp.int32).reshape(B), (0, Bp - B))
            args.append(act_p.reshape(Bp, 1))
        outs = call(*args)
        logits = outs[0][:B, :act_dims[head]]
        logp = outs[1][:B, 0] if compute_logp else None
        return logits, logp

    # --- tensor act_idx: per-sample head selection, ONE kernel, grid over samples ---
    idx = jnp.asarray(act_idx).astype(jnp.int32).reshape(B)
    act_arr = (jnp.zeros((B,), jnp.int32) if act is None
               else jnp.asarray(act).astype(jnp.int32).reshape(B))
    obs3d = obs.reshape(B, 1, obs_dim)
    call = _get_per_sample_call(B, obs_dim, pad, n_heads, compute_logp)
    outs = call(idx, act_arr, obs3d, *weights)
    logits_pad = outs[0][:, 0, :]                       # [B, PAD]
    logp = outs[1][:, 0, 0] if compute_logp else None
    # Host head indices only needed to build the ragged python list (API parity with
    # the torch module); fetched AFTER the kernel has been dispatched.
    idx_host = np.asarray(jax.device_get(idx))
    pi_list = [logits_pad[i, :act_dims[int(idx_host[i])]] for i in range(B)]
    return pi_list, logp


# ---------------------------------------------------------------------------
# Pure-JAX reference (mirrors the kernel's bf16-at-MXU / f32-elsewhere numerics)
# ---------------------------------------------------------------------------
def _reference_forward_head(params, obs, head, act):
    h1 = jnp.maximum(
        jnp.dot(obs.astype(jnp.bfloat16), params["w1"],
                preferred_element_type=jnp.float32) + params["b1"], 0.0)
    h2 = jnp.maximum(
        jnp.dot(h1.astype(jnp.bfloat16), params["w2"],
                preferred_element_type=jnp.float32) + params["b2"], 0.0)
    logits_pad = jnp.tanh(
        jnp.dot(h2.astype(jnp.bfloat16), params["w3_all"][head],
                preferred_element_type=jnp.float32) + params["b3_all"][head])
    ad = params["act_dim_list"][head]
    logits = logits_pad[:, :ad]
    if act is None:
        return logits, None
    logp_all = jax.nn.log_softmax(logits, axis=-1)
    logp = jnp.take_along_axis(logp_all, jnp.asarray(act, jnp.int32)[:, None],
                               axis=-1)[:, 0]
    return logits, logp


if __name__ == "__main__":
    obs_dim = 12
    act_dim_list = [6, 10, 8]
    B = 8

    params = init_params(obs_dim, act_dim_list, seed=0)

    key = jax.random.PRNGKey(0)
    k_obs, k_act, k_idx = jax.random.split(key, 3)
    obs = jax.random.normal(k_obs, (B, obs_dim), jnp.float32)

    # --- scalar act_idx branch (batched, single head, with logp) ---
    head = 1
    act = jax.random.randint(k_act, (B,), 0, act_dim_list[head], jnp.int32)
    logits, logp = forward(params, obs, head, act)
    jax.block_until_ready((logits, logp))
    ref_logits, ref_logp = _reference_forward_head(params, obs, head, act)
    assert logits.shape == (B, act_dim_list[head])
    assert jnp.allclose(logits, ref_logits, atol=1e-3), "logits mismatch"
    assert jnp.allclose(logp, ref_logp, atol=1e-3), "logp mismatch"

    # --- scalar act_idx branch, act=None (logp tail compiled out) ---
    logits2, logp2 = forward(params, obs, 2, None)
    jax.block_until_ready(logits2)
    assert logp2 is None and logits2.shape == (B, act_dim_list[2])
    ref_logits2, _ = _reference_forward_head(params, obs, 2, None)
    assert jnp.allclose(logits2, ref_logits2, atol=1e-3), "logits mismatch (no-act)"

    # --- tensor act_idx branch (per-sample head selection, single kernel) ---
    act_idx_vec = jax.random.randint(k_idx, (B,), 0, len(act_dim_list), jnp.int32)
    act_vec = jnp.zeros((B,), jnp.int32)  # action 0 valid for every head
    pi_list, logp_vec = forward(params, obs, act_idx_vec, act_vec)
    jax.block_until_ready((pi_list, logp_vec))
    assert len(pi_list) == B and logp_vec.shape == (B,)
    idx_host = np.asarray(jax.device_get(act_idx_vec))
    for i in range(B):
        h = int(idx_host[i])
        rl, rp = _reference_forward_head(params, obs[i:i + 1], h, act_vec[i:i + 1])
        assert pi_list[i].shape == (act_dim_list[h],)
        assert jnp.allclose(pi_list[i], rl[0], atol=1e-3), f"per-sample logits {i}"
        assert jnp.allclose(logp_vec[i], rp[0], atol=1e-3), f"per-sample logp {i}"

    print("KERNEL_OK")
</pallas_src>

<mosaic_0001>
module attributes {stable_mosaic.version = 11 : i64} {
  func.func @_batched_head_kernel(%arg0: i32, %arg1: memref<1xi32, #tpu.memory_space<smem>>, %arg2: memref<8x12xf32, #tpu.memory_space<vmem>>, %arg3: memref<12x128xbf16, #tpu.memory_space<vmem>>, %arg4: memref<1x128xf32, #tpu.memory_space<vmem>>, %arg5: memref<128x64xbf16, #tpu.memory_space<vmem>>, %arg6: memref<1x64xf32, #tpu.memory_space<vmem>>, %arg7: memref<1x64x128xbf16, #tpu.memory_space<vmem>>, %arg8: memref<1x1x128xf32, #tpu.memory_space<vmem>>, %arg9: memref<1x1x128xf32, #tpu.memory_space<vmem>>, %arg10: memref<8x1xi32, #tpu.memory_space<vmem>>, %arg11: memref<8x128xf32, #tpu.memory_space<vmem>>, %arg12: memref<8x1xf32, #tpu.memory_space<vmem>>) attributes {dimension_semantics = [#tpu.dimension_semantics<parallel>], iteration_bounds = array<i64: 1>, scalar_prefetch = 1 : i64, scratch_operands = 0 : i64, tpu.core_type = #tpu.core_type<tc>, window_params = [{transform_indices = @transform_0, window_bounds = array<i64: 8, 12>}, {pipeline_mode = #tpu.pipeline_mode<synchronous>, transform_indices = @transform_1, window_bounds = array<i64: 12, 128>}, {pipeline_mode = #tpu.pipeline_mode<synchronous>, transform_indices = @transform_2, window_bounds = array<i64: 1, 128>}, {pipeline_mode = #tpu.pipeline_mode<synchronous>, transform_indices = @transform_3, window_bounds = array<i64: 128, 64>}, {pipeline_mode = #tpu.pipeline_mode<synchronous>, transform_indices = @transform_4, window_bounds = array<i64: 1, 64>}, {transform_indices = @transform_5, window_bounds = array<i64: 1, 64, 128>}, {transform_indices = @transform_6, window_bounds = array<i64: 1, 1, 128>}, {transform_indices = @transform_7, window_bounds = array<i64: 1, 1, 128>}, {transform_indices = @transform_8, window_bounds = array<i64: 8, 1>}, {transform_indices = @transform_9, window_bounds = array<i64: 8, 128>}, {transform_indices = @transform_10, window_bounds = array<i64: 8, 1>}]} {
    %c0 = arith.constant 0 : index
    %c0_0 = arith.constant 0 : index
    %0 = vector.load %arg2[%c0, %c0_0] : memref<8x12xf32, #tpu.memory_space<vmem>>, vector<8x12xf32>
    %1 = arith.truncf %0 : vector<8x12xf32> to vector<8x12xbf16>
    %c0_1 = arith.constant 0 : index
    %c0_2 = arith.constant 0 : index
    %2 = vector.load %arg3[%c0_1, %c0_2] : memref<12x128xbf16, #tpu.memory_space<vmem>>, vector<12x128xbf16>
    %cst = arith.constant dense<0.000000e+00> : vector<8x128xf32>
    %3 = tpu.matmul %1, %2, %cst {dimension_numbers = #tpu.dot_dimension_numbers<[1], [0], [0], [1], [0, 0, 1, 1], [], []>} : vector<8x12xbf16>, vector<12x128xbf16>, vector<8x128xf32> -> vector<8x128xf32>
    %c0_3 = arith.constant 0 : index
    %c0_4 = arith.constant 0 : index
    %4 = vector.load %arg4[%c0_3, %c0_4] : memref<1x128xf32, #tpu.memory_space<vmem>>, vector<1x128xf32>
    %5 = vector.broadcast %4 : vector<1x128xf32> to vector<8x128xf32>
    %6 = arith.addf %3, %5 : vector<8x128xf32>
    %cst_5 = arith.constant 0.000000e+00 : f32
    %7 = vector.broadcast %cst_5 : f32 to vector<8x128xf32>
    %8 = arith.maximumf %6, %7 : vector<8x128xf32>
    %9 = arith.truncf %8 : vector<8x128xf32> to vector<8x128xbf16>
    %c0_6 = arith.constant 0 : index
    %c0_7 = arith.constant 0 : index
    %10 = vector.load %arg5[%c0_6, %c0_7] : memref<128x64xbf16, #tpu.memory_space<vmem>>, vector<128x64xbf16>
    %cst_8 = arith.constant dense<0.000000e+00> : vector<8x64xf32>
    %11 = tpu.matmul %9, %10, %cst_8 {dimension_numbers = #tpu.dot_dimension_numbers<[1], [0], [0], [1], [0, 0, 1, 1], [], []>} : vector<8x128xbf16>, vector<128x64xbf16>, vector<8x64xf32> -> vector<8x64xf32>
    %c0_9 = arith.constant 0 : index
    %c0_10 = arith.constant 0 : index
    %12 = vector.load %arg6[%c0_9, %c0_10] : memref<1x64xf32, #tpu.memory_space<vmem>>, vector<1x64xf32>
    %13 = vector.broadcast %12 : vector<1x64xf32> to vector<8x64xf32>
    %14 = arith.addf %11, %13 : vector<8x64xf32>
    %cst_11 = arith.constant 0.000000e+00 : f32
    %15 = vector.broadcast %cst_11 : f32 to vector<8x64xf32>
    %16 = arith.maximumf %14, %15 : vector<8x64xf32>
    %17 = arith.truncf %16 : vector<8x64xf32> to vector<8x64xbf16>
    %c0_12 = arith.constant 0 : index
    %c0_13 = arith.constant 0 : index
    %c0_14 = arith.constant 0 : index
    %18 = vector.load %arg7[%c0_12, %c0_13, %c0_14] : memref<1x64x128xbf16, #tpu.memory_space<vmem>>, vector<1x64x128xbf16>
    %19 = vector.shape_cast %18 : vector<1x64x128xbf16> to vector<64x128xbf16>
    %cst_15 = arith.constant dense<0.000000e+00> : vector<8x128xf32>
    %20 = tpu.matmul %17, %19, %cst_15 {dimension_numbers = #tpu.dot_dimension_numbers<[1], [0], [0], [1], [0, 0, 1, 1], [], []>} : vector<8x64xbf16>, vector<64x128xbf16>, vector<8x128xf32> -> vector<8x128xf32>
    %c0_16 = arith.constant 0 : index
    %c0_17 = arith.constant 0 : index
    %c0_18 = arith.constant 0 : index
    %21 = vector.load %arg8[%c0_16, %c0_17, %c0_18] : memref<1x1x128xf32, #tpu.memory_space<vmem>>, vector<1x1x128xf32>
    %22 = vector.shape_cast %21 : vector<1x1x128xf32> to vector<1x128xf32>
    %23 = vector.broadcast %22 : vector<1x128xf32> to vector<8x128xf32>
    %24 = arith.addf %20, %23 : vector<8x128xf32>
    %25 = math.tanh %24 : vector<8x128xf32>
    %c0_19 = arith.constant 0 : index
    %c0_20 = arith.constant 0 : index
    %26 = vector.load %arg11[%c0_19, %c0_20] : memref<8x128xf32, #tpu.memory_space<vmem>>, vector<8x128xf32>
    tpu.vector_store %arg11[%c0_19, %c0_20], %25 {strides = array<i32>} : memref<8x128xf32, #tpu.memory_space<vmem>>, vector<8x128xf32>,
    %c0_21 = arith.constant 0 : index
    %c0_22 = arith.constant 0 : index
    %c0_23 = arith.constant 0 : index
    %27 = vector.load %arg9[%c0_21, %c0_22, %c0_23] : memref<1x1x128xf32, #tpu.memory_space<vmem>>, vector<1x1x128xf32>
    %28 = vector.shape_cast %27 : vector<1x1x128xf32> to vector<1x128xf32>
    %29 = vector.broadcast %28 : vector<1x128xf32> to vector<8x128xf32>
    %30 = arith.addf %25, %29 : vector<8x128xf32>
    %cst_24 = arith.constant dense<0xFF800000> : vector<8xf32>
    %31 = vector.multi_reduction <maximumf>, %30, %cst_24 [1] : vector<8x128xf32> to vector<8xf32>
    %32 = vector.shape_cast %31 : vector<8xf32> to vector<8x1xf32>
    %33 = vector.broadcast %32 : vector<8x1xf32> to vector<8x128xf32>
    %34 = arith.subf %30, %33 : vector<8x128xf32>
    %35 = math.exp %34 : vector<8x128xf32>
    %cst_25 = arith.constant dense<0.000000e+00> : vector<8xf32>
    %36 = vector.multi_reduction <add>, %35, %cst_25 [1] : vector<8x128xf32> to vector<8xf32>
    %37 = vector.shape_cast %36 : vector<8xf32> to vector<8x1xf32>
    %38 = math.log %37 : vector<8x1xf32>
    %39 = arith.addf %32, %38 : vector<8x1xf32>
    %c0_26 = arith.constant 0 : index
    %c0_27 = arith.constant 0 : index
    %40 = vector.load %arg10[%c0_26, %c0_27] : memref<8x1xi32, #tpu.memory_space<vmem>>, vector<8x1xi32>
    %41 = tpu.iota {dimensions = array<i32: 1>} : vector<8x128xi32>
    %42 = vector.broadcast %40 : vector<8x1xi32> to vector<8x128xi32>
    %43 = arith.cmpi eq, %41, %42 : vector<8x128xi32>
    %cst_28 = arith.constant -1.000000e+30 : f32
    %44 = vector.broadcast %cst_28 : f32 to vector<8x128xf32>
    %45 = arith.select %43, %30, %44 : vector<8x128xi1>, vector<8x128xf32>
    %cst_29 = arith.constant dense<0xFF800000> : vector<8xf32>
    %46 = vector.multi_reduction <maximumf>, %45, %cst_29 [1] : vector<8x128xf32> to vector<8xf32>
    %47 = vector.shape_cast %46 : vector<8xf32> to vector<8x1xf32>
    %48 = arith.subf %47, %39 : vector<8x1xf32>
    %c0_30 = arith.constant 0 : index
    %c0_31 = arith.constant 0 : index
    %49 = vector.load %arg12[%c0_30, %c0_31] : memref<8x1xf32, #tpu.memory_space<vmem>>, vector<8x1xf32>
    tpu.vector_store %arg12[%c0_30, %c0_31], %48 {strides = array<i32>} : memref<8x1xf32, #tpu.memory_space<vmem>>, vector<8x1xf32>,
    return
  }
  func.func @transform_0(%arg0: i32, %arg1: memref<1xi32, #tpu.memory_space<smem>>) -> (i32, i32) {
    %c0_i32 = arith.constant 0 : i32
    %c0_i32_0 = arith.constant 0 : i32
    return %arg0, %c0_i32 : i32, i32
  }
  func.func @transform_1(%arg0: i32, %arg1: memref<1xi32, #tpu.memory_space<smem>>) -> (i32, i32) {
    %c0_i32 = arith.constant 0 : i32
    %c0_i32_0 = arith.constant 0 : i32
    %c0_i32_1 = arith.constant 0 : i32
    return %c0_i32, %c0_i32_0 : i32, i32
  }
  func.func @transform_2(%arg0: i32, %arg1: memref<1xi32, #tpu.memory_space<smem>>) -> (i32, i32) {
    %c0_i32 = arith.constant 0 : i32
    %c0_i32_0 = arith.constant 0 : i32
    %c0_i32_1 = arith.constant 0 : i32
    return %c0_i32, %c0_i32_0 : i32, i32
  }
  func.func @transform_3(%arg0: i32, %arg1: memref<1xi32, #tpu.memory_space<smem>>) -> (i32, i32) {
    %c0_i32 = arith.constant 0 : i32
    %c0_i32_0 = arith.constant 0 : i32
    %c0_i32_1 = arith.constant 0 : i32
    return %c0_i32, %c0_i32_0 : i32, i32
  }
  func.func @transform_4(%arg0: i32, %arg1: memref<1xi32, #tpu.memory_space<smem>>) -> (i32, i32) {
    %c0_i32 = arith.constant 0 : i32
    %c0_i32_0 = arith.constant 0 : i32
    %c0_i32_1 = arith.constant 0 : i32
    return %c0_i32, %c0_i32_0 : i32, i32
  }
  func.func @transform_5(%arg0: i32, %arg1: memref<1xi32, #tpu.memory_space<smem>>) -> (i32, i32, i32) {
    %c0 = arith.constant 0 : index
    %0 = memref.load %arg1[%c0] : memref<1xi32, #tpu.memory_space<smem>>
    %c0_i32 = arith.constant 0 : i32
    %c0_i32_0 = arith.constant 0 : i32
    %c0_i32_1 = arith.constant 0 : i32
    return %0, %c0_i32, %c0_i32_0 : i32, i32, i32
  }
  func.func @transform_6(%arg0: i32, %arg1: memref<1xi32, #tpu.memory_space<smem>>) -> (i32, i32, i32) {
    %c0 = arith.constant 0 : index
    %0 = memref.load %arg1[%c0] : memref<1xi32, #tpu.memory_space<smem>>
    %c0_i32 = arith.constant 0 : i32
    %c0_i32_0 = arith.constant 0 : i32
    %c0_i32_1 = arith.constant 0 : i32
    return %0, %c0_i32, %c0_i32_0 : i32, i32, i32
  }
  func.func @transform_7(%arg0: i32, %arg1: memref<1xi32, #tpu.memory_space<smem>>) -> (i32, i32, i32) {
    %c0 = arith.constant 0 : index
    %0 = memref.load %arg1[%c0] : memref<1xi32, #tpu.memory_space<smem>>
    %c0_i32 = arith.constant 0 : i32
    %c0_i32_0 = arith.constant 0 : i32
    %c0_i32_1 = arith.constant 0 : i32
    return %0, %c0_i32, %c0_i32_0 : i32, i32, i32
  }
  func.func @transform_8(%arg0: i32, %arg1: memref<1xi32, #tpu.memory_space<smem>>) -> (i32, i32) {
    %c0_i32 = arith.constant 0 : i32
    %c0_i32_0 = arith.constant 0 : i32
    return %arg0, %c0_i32 : i32, i32
  }
  func.func @transform_9(%arg0: i32, %arg1: memref<1xi32, #tpu.memory_space<smem>>) -> (i32, i32) {
    %c0_i32 = arith.constant 0 : i32
    %c0_i32_0 = arith.constant 0 : i32
    return %arg0, %c0_i32 : i32, i32
  }
  func.func @transform_10(%arg0: i32, %arg1: memref<1xi32, #tpu.memory_space<smem>>) -> (i32, i32) {
    %c0_i32 = arith.constant 0 : i32
    %c0_i32_0 = arith.constant 0 : i32
    return %arg0, %c0_i32 : i32, i32
  }
}

</mosaic_0001>

<llo_original>
// kernel: tpu_custom_call.1
$region0: #{tpu_custom_call.1}
  #allocation0 [shape = 'u32[]', space=smem, size = 0x4, offset = 0x4, fixed_abs, tag = 'smem constant byte address 0x4 - core index']
  #allocation1 [shape = 'u32[144,128]{1,0:T(1,128)}', space=vmem, size = 0x12000, scoped, tag = 'internal scratch']
  #allocation2 [shape = 's32[1]{0}', space=sflag, size = 0x4, scoped, tag = 'scoped memory for tpu_custom_call.1']
  #allocation3 [shape = 's32[1]{0:T(128)S(6)}', space=smem, size = 0x200, scoped, tag = 'prefetched SMEM operand 0']
  %s0 = inlined_call_operand.<no memory space> [shape: s32[1], index: 0, kind: input, shape index: {}]
  %s1 = inlined_call_operand.vmem [shape: f32[8,12], index: 1, kind: input, shape index: {}]
  %s2 = inlined_call_operand.vmem [shape: bf16[12,128], index: 2, kind: input, shape index: {}]
  %s3 = inlined_call_operand.vmem [shape: f32[1,128], index: 3, kind: input, shape index: {}]
  %s4 = inlined_call_operand.vmem [shape: bf16[128,64], index: 4, kind: input, shape index: {}]
  %s5 = inlined_call_operand.hbm [shape: f32[1,64], index: 5, kind: input, shape index: {}]
  %s6 = inlined_call_operand.vmem [shape: bf16[3,64,128], index: 6, kind: input, shape index: {}]
  %s7 = inlined_call_operand.vmem [shape: f32[3,1,128], index: 7, kind: input, shape index: {}]
  %s8 = inlined_call_operand.vmem [shape: f32[3,1,128], index: 8, kind: input, shape index: {}]
  %s9 = inlined_call_operand.vmem [shape: s32[8,1], index: 9, kind: input, shape index: {}]
  %s10 = inlined_call_operand.hbm [shape: f32[8,128], index: 10, kind: output, shape index: {0}]
  %s11 = inlined_call_operand.vmem [shape: f32[8,1], index: 11, kind: output, shape index: {1}]
  %12 = xla_tuple %s10, %s11
  %s13 = sld [smem:[#allocation0]]
  $region58: #{tpu_custom_call.1} parent=0
    _
  %s15 = ssub.s32 1, %s13
  %s16 = scalar_select 0, %s15, %s13
  %17 = sst [smem:[#allocation3]] %s0
  $region1: #{tpu_custom_call.1} parent=0
    #allocation4 [shape = 'u8[512]{0}', space=vmem, size = 0x400, scoped, tag = 'input window, operand 5, single buffered']
    #allocation5 [shape = 's32[1]{0}', space=sflag, size = 0x4, scoped, tag = 'scoped memory for tpu_custom_call.1']
    #allocation6 [shape = 's32[1]{0}', space=sflag, size = 0x4, scoped, tag = 'scoped memory for tpu_custom_call.1']
    #allocation7 [shape = 'u8[4096]{0}', space=vmem, size = 0x1000, scoped, tag = 'output window, operand 0, single buffered']
    %18 = vsyncpa [#allocation5], 0
    %19 = vsyncpa [#allocation6], 0
    // Predicated region
    $region2: #{tpu_custom_call.1} parent=1 // pred_check
      _
    $region3: #{tpu_custom_call.1} parent=1 // pred_check_branch
      %21 = sbr.rel (0) target = $region5
    $region4: #{tpu_custom_call.1} parent=1 // pred_region
      _
    $region5: #{tpu_custom_call.1} parent=1 // pred_fallthru
      _
    // Predicated region
    $region6: #{tpu_custom_call.1} parent=1 // pred_check
      _
    $region7: #{tpu_custom_call.1} parent=1 // pred_check_branch
      %23 = sbr.rel (0) target = $region9
    $region8: #{tpu_custom_call.1} parent=1 // pred_region
      _
    $region9: #{tpu_custom_call.1} parent=1 // pred_fallthru
      _
    // Predicated region
    $region10: #{tpu_custom_call.1} parent=1 // pred_check
      _
    $region11: #{tpu_custom_call.1} parent=1 // pred_check_branch
      %25 = sbr.rel (0) target = $region13
    $region12: #{tpu_custom_call.1} parent=1 // pred_region
      _
    $region13: #{tpu_custom_call.1} parent=1 // pred_fallthru
      _
    // Predicated region
    $region14: #{tpu_custom_call.1} parent=1 // pred_check
      _
    $region15: #{tpu_custom_call.1} parent=1 // pred_check_branch
      %27 = sbr.rel (0) target = $region17
    $region16: #{tpu_custom_call.1} parent=1 // pred_region
      _
    $region17: #{tpu_custom_call.1} parent=1 // pred_fallthru
      _
    // Predicated region
    $region18: #{tpu_custom_call.1} parent=1 // pred_check
      _
    $region19: #{tpu_custom_call.1} parent=1 // pred_check_branch
      %29 = sbr.rel (0) target = $region21
    $region20: #{tpu_custom_call.1} parent=1 // pred_region
      %s31 = ssub.s32 16, 16
      %32 = vsyncadd [#allocation5], %s31
      %s34 = sshll.u32 [#allocation4], 4
      %s35 = int_to_ptr.vmem [resolvable:$true] %s34
      %37 = dma.hbm_to_vmem [thread:$0]  %s5, 16, %s35, [#allocation5]
    $region21: #{tpu_custom_call.1} parent=1 // pred_fallthru
      _
    // Predicated region
    $region22: #{tpu_custom_call.1} parent=1 // pred_check
      _
    $region23: #{tpu_custom_call.1} parent=1 // pred_check_branch
      %39 = sbr.rel (0) target = $region25
    $region24: #{tpu_custom_call.1} parent=1 // pred_region
      %s40 = sld [smem:[#allocation3]]
      %p41 = scmp.lt.s32.totalorder %s40, 2
      %s42 = scalar_select %p41, %s40, 2
      %s43 = smul.addr %s42, 8
      %s44 = smul.addr %s43, 4
      %s45 = scalar_lea.vmem %s6, %s44
      %s46 = sld [smem:[#allocation3]]
    $region25: #{tpu_custom_call.1} parent=1 // pred_fallthru
      _
    // Predicated region
    $region26: #{tpu_custom_call.1} parent=1 // pred_check
      _
    $region27: #{tpu_custom_call.1} parent=1 // pred_check_branch
      %48 = sbr.rel (0) target = $region29
    $region28: #{tpu_custom_call.1} parent=1 // pred_region
      %s49 = sld [smem:[#allocation3]]
      %p50 = scmp.lt.s32.totalorder %s49, 2
      %s51 = scalar_select %p50, %s49, 2
      %s52 = scalar_lea.vmem %s7, %s51
      %s53 = sld [smem:[#allocation3]]
    $region29: #{tpu_custom_call.1} parent=1 // pred_fallthru
      _
    // Predicated region
    $region30: #{tpu_custom_call.1} parent=1 // pred_check
      _
    $region31: #{tpu_custom_call.1} parent=1 // pred_check_branch
      %55 = sbr.rel (0) target = $region33
    $region32: #{tpu_custom_call.1} parent=1 // pred_region
      %s56 = sld [smem:[#allocation3]]
      %p57 = scmp.lt.s32.totalorder %s56, 2
      %s58 = scalar_select %p57, %s56, 2
      %s59 = scalar_lea.vmem %s8, %s58
      %s60 = sld [smem:[#allocation3]]
    $region33: #{tpu_custom_call.1} parent=1 // pred_fallthru
      _
    // Predicated region
    $region34: #{tpu_custom_call.1} parent=1 // pred_check
      _
    $region35: #{tpu_custom_call.1} parent=1 // pred_check_branch
      %62 = sbr.rel (0) target = $region37
    $region36: #{tpu_custom_call.1} parent=1 // pred_region
      _
    $region37: #{tpu_custom_call.1} parent=1 // pred_fallthru
      _
    // Predicated region
    $region38: #{tpu_custom_call.1} parent=1 // pred_check
      _
    $region39: #{tpu_custom_call.1} parent=1 // pred_check_branch
      %64 = sbr.rel (0) target = $region41
    $region40: #{tpu_custom_call.1} parent=1 // pred_region
      %65 = dma.done [#allocation5], 16
    $region41: #{tpu_custom_call.1} parent=1 // pred_fallthru
      _
    %s66 = sld [smem:[#allocation3]]
    %p67 = scmp.lt.s32.totalorder %s66, 2
    %s68 = scalar_select %p67, %s66, 2
    %s69 = smul.addr %s68, 8
    %s70 = smul.addr %s69, 4
    %s71 = scalar_lea.vmem %s6, %s70
    %s72 = sld [smem:[#allocation3]]
    %p73 = scmp.lt.s32.totalorder %s72, 2
    %s74 = scalar_select %p73, %s72, 2
    %s75 = scalar_lea.vmem %s7, %s74
    %s76 = sld [smem:[#allocation3]]
    %p77 = scmp.lt.s32.totalorder %s76, 2
    %s78 = scalar_select %p77, %s76, 2
    %s79 = scalar_lea.vmem %s8, %s78
    %s80 = sld [smem:[#allocation3]]
    %p81 = scmp.lt.s32.totalorder %s80, 2
    %s82 = scalar_select %p81, %s80, 2
    %s83 = smul.addr %s82, 8
    %s84 = smul.addr %s83, 4
    %s85 = scalar_lea.vmem %s6, %s84
    %s86 = sld [smem:[#allocation3]]
    %s87 = sld [smem:[#allocation3]]
    %p88 = scmp.lt.s32.totalorder %s87, 2
    %s89 = scalar_select %p88, %s87, 2
    %s90 = scalar_lea.vmem %s7, %s89
    %s91 = sld [smem:[#allocation3]]
    %s92 = sld [smem:[#allocation3]]
    %p93 = scmp.lt.s32.totalorder %s92, 2
    %s94 = scalar_select %p93, %s92, 2
    %s95 = scalar_lea.vmem %s8, %s94
    %s96 = sld [smem:[#allocation3]]
    %v98 = vld [vmem:[%s1] sm:$0xff]
    %v99 = vpack.c.bf16 %v98, %v98
    %v100 = vld [vmem:[%s2] sm:$0xf]
    %v101 = vld [vmem:[%s2 + $0x4] sm:$0x3]
    %v102 = vld [vmem:[%s3] sm:$0x1]
    %v104 = vlaneseq
    %v105 = vshrl.u32 %v104, 7
    %v106 = vsub.s32 0, %v105
    %v107 = vrot.slane %v102, %v106
    %v111 = vunpack.c.l.b16 %v100
    %v112 = vunpack.c.l.b16 %v101
    %v113 = vpack.c.b16 %v112, %v111
    %vm114 = vcmask 97280
    %v116 = vsel %vm114, %v99, 0
    %vm118 = vcmask 1045504
    %v120 = vsel %vm118, %v113, 0
    %122 = vmatprep.subr.bf16.mxu0 0
    %123 = vmatpush1.bf16.msra.mxu0 0
    %124 = vmatprep.subr.bf16.mxu0 0
    %125 = vmatpush1.bf16.msra.mxu0 0
    %126 = vmatprep.subr.bf16.mxu0 0
    %127 = vmatpush1.bf16.msra.mxu0 0
    %128 = vmatprep.subr.bf16.mxu0 0
    %129 = vmatpush1.bf16.msra.mxu0 0
    %130 = vmatprep.subr.bf16.mxu0 0
    %131 = vmatpush1.bf16.msra.mxu0 0
    %132 = vmatprep.subr.bf16.mxu0 0
    %133 = vmatpush1.bf16.msra.mxu0 0
    %134 = vmatprep.subr.bf16.mxu0 0
    %135 = vmatpush1.bf16.msra.mxu0 0
    %136 = vmatprep.subr.bf16.mxu0 0
    %137 = vmatpush1.bf16.msra.mxu0 %v120
    %138 = vmatprep.subr.bf16.mxu0 0
    %139 = vmatpush2.bf16.msra.mxu0 0
    %140 = vmatprep.subr.bf16.mxu0 0
    %141 = vmatpush2.bf16.msra.mxu0 0
    %142 = vmatprep.subr.bf16.mxu0 0
    %143 = vmatpush2.bf16.msra.mxu0 0
    %144 = vmatprep.subr.bf16.mxu0 0
    %145 = vmatpush2.bf16.msra.mxu0 0
    %146 = vmatprep.subr.bf16.mxu0 0
    %147 = vmatpush2.bf16.msra.mxu0 0
    %148 = vmatprep.subr.bf16.mxu0 0
    %149 = vmatpush2.bf16.msra.mxu0 0
    %150 = vmatprep.subr.bf16.mxu0 0
    %151 = vmatpush2.bf16.msra.mxu0 0
    %152 = vmatprep.subr.bf16.mxu0 0
    %153 = vmatpush2.bf16.msra.mxu0 0
    %154 = vmatprep.mubr.bf16.mxu0 0
    %155 = vmatmul.mubr.bf16.gmra.mxu0 %v116
    %v156 = vpop.f32.mrf.mxu0
    %v157 = vadd.f32 %v107, %v156
    %v158 = vpop.f32.mrf.mxu0
    %v159 = vpop.f32.mrf.mxu0
    %v160 = vpop.f32.mrf.mxu0
    %161 = vdwg.mxu0
    %v162 = vmax.f32 %v157, 0.0
    %v163 = vpack.c.bf16 %v162, %v162
    %v164 = vld [vmem:[%s4] sm:$0xf]
    %v165 = vld [vmem:[%s4 + $0x4] sm:$0xf]
    %v166 = vld [vmem:[%s4 + $0x8] sm:$0xf]
    %v167 = vld [vmem:[%s4 + $0xc] sm:$0xf]
    %v168 = vld [vmem:[%s4 + $0x10] sm:$0xf]
    %v169 = vld [vmem:[%s4 + $0x14] sm:$0xf]
    %v170 = vld [vmem:[%s4 + $0x18] sm:$0xf]
    %v171 = vld [vmem:[%s4 + $0x1c] sm:$0xf]
    %v172 = vld [vmem:[%s4 + $0x20] sm:$0xf]
    %v173 = vld [vmem:[%s4 + $0x24] sm:$0xf]
    %v174 = vld [vmem:[%s4 + $0x28] sm:$0xf]
    %v175 = vld [vmem:[%s4 + $0x2c] sm:$0xf]
    %v176 = vld [vmem:[%s4 + $0x30] sm:$0xf]
    %v177 = vld [vmem:[%s4 + $0x34] sm:$0xf]
    %v178 = vld [vmem:[%s4 + $0x38] sm:$0xf]
    %v179 = vld [vmem:[%s4 + $0x3c] sm:$0xf]
    %v180 = vld [vmem:[#allocation4] sm:$0x1]
    %v182 = vlaneseq
    %v183 = vshrl.u32 %v182, 7
    %v184 = vsub.s32 0, %v183
    %v185 = vrot.slane %v180, %v184
    %v203 = vunpack.c.l.b16 %v164
    %v204 = vunpack.c.l.b16 %v165
    %v205 = vunpack.c.l.b16 %v166
    %v206 = vunpack.c.l.b16 %v167
    %v207 = vunpack.c.l.b16 %v168
    %v208 = vunpack.c.l.b16 %v169
    %v209 = vunpack.c.l.b16 %v170
    %v210 = vunpack.c.l.b16 %v171
    %v211 = vunpack.c.l.b16 %v172
    %v212 = vunpack.c.l.b16 %v173
    %v213 = vunpack.c.l.b16 %v174
    %v214 = vunpack.c.l.b16 %v175
    %v215 = vunpack.c.l.b16 %v176
    %v216 = vunpack.c.l.b16 %v177
    %v217 = vunpack.c.l.b16 %v178
    %v218 = vunpack.c.l.b16 %v179
    %v219 = vpack.c.b16 %v204, %v203
    %v220 = vpack.c.b16 %v206, %v205
    %v221 = vpack.c.b16 %v208, %v207
    %v222 = vpack.c.b16 %v210, %v209
    %v223 = vpack.c.b16 %v212, %v211
    %v224 = vpack.c.b16 %v214, %v213
    %v225 = vpack.c.b16 %v216, %v215
    %v226 = vpack.c.b16 %v218, %v217
    %235 = vmatprep.subr.bf16.mxu0 0
    %236 = vmatpush1.bf16.msra.mxu0 %v226
    %237 = vmatprep.subr.bf16.mxu0 0
    %238 = vmatpush1.bf16.msra.mxu0 %v225
    %239 = vmatprep.subr.bf16.mxu0 0
    %240 = vmatpush1.bf16.msra.mxu0 %v224
    %241 = vmatprep.subr.bf16.mxu0 0
    %242 = vmatpush1.bf16.msra.mxu0 %v223
    %243 = vmatprep.subr.bf16.mxu0 0
    %244 = vmatpush1.bf16.msra.mxu0 %v222
    %245 = vmatprep.subr.bf16.mxu0 0
    %246 = vmatpush1.bf16.msra.mxu0 %v221
    %247 = vmatprep.subr.bf16.mxu0 0
    %248 = vmatpush1.bf16.msra.mxu0 %v220
    %249 = vmatprep.subr.bf16.mxu0 0
    %250 = vmatpush1.bf16.msra.mxu0 %v219
    %251 = vmatprep.subr.bf16.mxu0 0
    %252 = vmatpush2.bf16.msra.mxu0 0
    %253 = vmatprep.subr.bf16.mxu0 0
    %254 = vmatpush2.bf16.msra.mxu0 0
    %255 = vmatprep.subr.bf16.mxu0 0
    %256 = vmatpush2.bf16.msra.mxu0 0
    %257 = vmatprep.subr.bf16.mxu0 0
    %258 = vmatpush2.bf16.msra.mxu0 0
    %259 = vmatprep.subr.bf16.mxu0 0
    %260 = vmatpush2.bf16.msra.mxu0 0
    %261 = vmatprep.subr.bf16.mxu0 0
    %262 = vmatpush2.bf16.msra.mxu0 0
    %263 = vmatprep.subr.bf16.mxu0 0
    %264 = vmatpush2.bf16.msra.mxu0 0
    %265 = vmatprep.subr.bf16.mxu0 0
    %266 = vmatpush2.bf16.msra.mxu0 0
    %267 = vmatprep.mubr.bf16.mxu0 0
    %268 = vmatmul.mubr.bf16.gmra.mxu0 %v163
    %v269 = vpop.f32.mrf.mxu0
    %v270 = vadd.f32 %v185, %v269
    %v271 = vpop.f32.mrf.mxu0
    %v272 = vpop.f32.mrf.mxu0
    %v273 = vpop.f32.mrf.mxu0
    %274 = vdwg.mxu0
    %v275 = vmax.f32 %v270, 0.0
    %v276 = vpack.c.bf16 %v275, %v275
    %v277 = vld [vmem:[%s85] sm:$0xf]
    %v278 = vld [vmem:[%s85 + $0x4] sm:$0xf]
    %v279 = vld [vmem:[%s85 + $0x8] sm:$0xf]
    %v280 = vld [vmem:[%s85 + $0xc] sm:$0xf]
    %v281 = vld [vmem:[%s85 + $0x10] sm:$0xf]
    %v282 = vld [vmem:[%s85 + $0x14] sm:$0xf]
    %v283 = vld [vmem:[%s85 + $0x18] sm:$0xf]
    %v284 = vld [vmem:[%s85 + $0x1c] sm:$0xf]
    %v285 = vld [vmem:[%s90] sm:$0x1]
    %v287 = vlaneseq
    %v288 = vshrl.u32 %v287, 7
    %v289 = vsub.s32 0, %v288
    %v290 = vrot.slane %v285, %v289
    %v300 = vunpack.c.l.b16 %v277
    %v301 = vunpack.c.l.b16 %v278
    %v302 = vunpack.c.l.b16 %v279
    %v303 = vunpack.c.l.b16 %v280
    %v304 = vunpack.c.l.b16 %v281
    %v305 = vunpack.c.l.b16 %v282
    %v306 = vunpack.c.l.b16 %v283
    %v307 = vunpack.c.l.b16 %v284
    %v308 = vpack.c.b16 %v301, %v300
    %v309 = vpack.c.b16 %v303, %v302
    %v310 = vpack.c.b16 %v305, %v304
    %v311 = vpack.c.b16 %v307, %v306
    %vm316 = vcmask 523264
    %v318 = vsel %vm316, %v276, 0
    %320 = vmatprep.subr.bf16.mxu0 0
    %321 = vmatpush1.bf16.msra.mxu0 0
    %322 = vmatprep.subr.bf16.mxu0 0
    %323 = vmatpush1.bf16.msra.mxu0 0
    %324 = vmatprep.subr.bf16.mxu0 0
    %325 = vmatpush1.bf16.msra.mxu0 0
    %326 = vmatprep.subr.bf16.mxu0 0
    %327 = vmatpush1.bf16.msra.mxu0 0
    %328 = vmatprep.subr.bf16.mxu0 0
    %329 = vmatpush1.bf16.msra.mxu0 %v311
    %330 = vmatprep.subr.bf16.mxu0 0
    %331 = vmatpush1.bf16.msra.mxu0 %v310
    %332 = vmatprep.subr.bf16.mxu0 0
    %333 = vmatpush1.bf16.msra.mxu0 %v309
    %334 = vmatprep.subr.bf16.mxu0 0
    %335 = vmatpush1.bf16.msra.mxu0 %v308
    %336 = vmatprep.subr.bf16.mxu0 0
    %337 = vmatpush2.bf16.msra.mxu0 0
    %338 = vmatprep.subr.bf16.mxu0 0
    %339 = vmatpush2.bf16.msra.mxu0 0
    %340 = vmatprep.subr.bf16.mxu0 0
    %341 = vmatpush2.bf16.msra.mxu0 0
    %342 = vmatprep.subr.bf16.mxu0 0
    %343 = vmatpush2.bf16.msra.mxu0 0
    %344 = vmatprep.subr.bf16.mxu0 0
    %345 = vmatpush2.bf16.msra.mxu0 0
    %346 = vmatprep.subr.bf16.mxu0 0
    %347 = vmatpush2.bf16.msra.mxu0 0
    %348 = vmatprep.subr.bf16.mxu0 0
    %349 = vmatpush2.bf16.msra.mxu0 0
    %350 = vmatprep.subr.bf16.mxu0 0
    %351 = vmatpush2.bf16.msra.mxu0 0
    %352 = vmatprep.mubr.bf16.mxu0 0
    %353 = vmatmul.mubr.bf16.gmra.mxu0 %v318
    %v354 = vpop.f32.mrf.mxu0
    %v355 = vadd.f32 %v290, %v354
    %v356 = vpop.f32.mrf.mxu0
    %v357 = vpop.f32.mrf.mxu0
    %v358 = vpop.f32.mrf.mxu0
    %359 = vdwg.mxu0
    %v360 = vtanh.pop %v355
    %361 = vst [vmem:[#allocation7] sm:$0xff] %v360
    %v362 = vld [vmem:[%s95] sm:$0x1]
    %v364 = vlaneseq
    %v365 = vshrl.u32 %v364, 7
    %v366 = vsub.s32 0, %v365
    %v367 = vrot.slane %v362, %v366
    %v369 = vadd.f32 %v360, %v367
    %370 = vmax.xlane.f32.xlu0 %v369
    %v371 = vpop.xlane.xlu0 %370
    %v372 = vsub.f32 %v369, %v371
    %v373 = vmul.f32 %v372, 1.442695
    %v374 = vpow.pop %v373
    %375 = vadd.xlane.f32.xlu0 %v374
    %v376 = vpop.xlane.xlu0 %375
    %v377 = vlog2.pop %v376
    %v378 = vmul.f32 %v377, 0.6931472
    %v379 = vadd.f32 %v371, %v378
    %v380 = vld [vmem:[%s9] sm:$0xff]
    %v381 = vlaneseq
    %v382 = vand.u32 %v381, 127
    %383 = vset.pattern.permute.xlu0 0
    %384 = vperm.xlu0 %383, %v380
    %v385 = vpop.permute.xlu0 %384
    %vm386 = vcmp.eq.s32.totalorder %v382, %v385
    %v387 = vsel %vm386, %v369, -1e+30
    %388 = vmax.xlane.f32.xlu0 %v387
    %v389 = vpop.xlane.xlu0 %388
    %v390 = vsub.f32 %v389, %v379
    %vm391 = vcmask 7168
    %392 = vst.msk [vmem:[%s11] sm:$0xff] %vm391, %v390
    // Predicated region
    $region42: #{tpu_custom_call.1} parent=1 // pred_check
      _
    $region43: #{tpu_custom_call.1} parent=1 // pred_check_branch
      %394 = sbr.rel (0) target = $region45
    $region44: #{tpu_custom_call.1} parent=1 // pred_region
      %s396 = ssub.s32 128, 128
      %397 = vsyncadd [#allocation6], %s396
      %s399 = sshll.u32 [#allocation7], 4
      %s400 = int_to_ptr.vmem [resolvable:$true] %s399
      %402 = dma.vmem_to_hbm [thread:$0]  %s400, 128, %s10, [#allocation6]
    $region45: #{tpu_custom_call.1} parent=1 // pred_fallthru
      _
    // Predicated region
    $region46: #{tpu_custom_call.1} parent=1 // pred_check
      _
    $region47: #{tpu_custom_call.1} parent=1 // pred_check_branch
      %404 = sbr.rel (0) target = $region49
    $region48: #{tpu_custom_call.1} parent=1 // pred_region
      _
    $region49: #{tpu_custom_call.1} parent=1 // pred_fallthru
      _
    // Predicated region
    $region50: #{tpu_custom_call.1} parent=1 // pred_check
      _
    $region51: #{tpu_custom_call.1} parent=1 // pred_check_branch
      %406 = sbr.rel (0) target = $region53
    $region52: #{tpu_custom_call.1} parent=1 // pred_region
      %407 = dma.done [#allocation6], 128
    $region53: #{tpu_custom_call.1} parent=1 // pred_fallthru
      _
    // Predicated region
    $region54: #{tpu_custom_call.1} parent=1 // pred_check
      _
    $region55: #{tpu_custom_call.1} parent=1 // pred_check_branch
      %409 = sbr.rel (0) target = $region57
    $region56: #{tpu_custom_call.1} parent=1 // pred_region
      _
    $region57: #{tpu_custom_call.1} parent=1 // pred_fallthru
      _
    %410 = vsyncpa [#allocation5], 1
    %411 = vsyncpa [#allocation6], 1

</llo_original>
